<compile_context>
chip_gen: v6e
topology: v6e:2x2x1
jax: 0.10.0
libtpu: 0.0.40
codegen_flags: <defaults>
</compile_context>

<pallas_src>
import functools
import math

import jax
import jax.numpy as jnp
from jax.experimental import pallas as pl
from jax.experimental.pallas import tpu as pltpu


def _round_up(x: int, m: int) -> int:
    return ((x + m - 1) // m) * m


def _cdefunc_kernel(z_ref, wh_ref, bh_ref, wo_ref, bo_ref, out_ref, h_sc,
                    *, num_hidden):
    """Fused MLP: hidden trunk (ReLU) + head tile (Tanh).

    z_ref : (tb, Hp)            f32   input tile
    wh_ref: (L-1, Hp, Hp)       bf16  stacked hidden weights (resident)
    bh_ref: (L-1, 1, Hp)        f32   stacked hidden biases  (resident)
    wo_ref: (Hp, tn)            bf16  head weight tile
    bo_ref: (1, tn)             f32   head bias tile
    out_ref:(tb, tn)            f32   output tile
    h_sc  : (tb, Hp)            bf16  trunk activation scratch (reused across n)
    """
    # Hidden trunk: compute once per batch tile (first head-output tile only).
    @pl.when(pl.program_id(1) == 0)
    def _():
        h = z_ref[...]                                    # f32 (tb, Hp)
        for l in range(num_hidden):                       # Linear(H, H) + ReLU
            w = wh_ref[l]                                 # bf16 (Hp, Hp)
            b = bh_ref[l]                                 # f32  (1, Hp)
            h = jnp.maximum(
                jnp.dot(h.astype(jnp.bfloat16), w,
                        preferred_element_type=jnp.float32) + b,
                0.0)
        h_sc[...] = h.astype(jnp.bfloat16)

    # Head tile: Linear(H, I*H) + Tanh, f32 accumulate / elementwise.
    acc = jnp.dot(h_sc[...], wo_ref[...], preferred_element_type=jnp.float32)
    out_ref[...] = jnp.tanh(acc + bo_ref[...]).astype(out_ref.dtype)


def _resident_spec(shape):
    """Constant-index (fully resident) block: single-buffer to halve VMEM."""
    index_map = lambda i, n: (0,) * len(shape)
    try:
        return pl.BlockSpec(shape, index_map, pipeline_mode=pl.Buffered(1))
    except TypeError:   # older JAX without pipeline_mode: fall back gracefully
        return pl.BlockSpec(shape, index_map)


def cdefunc_pallas(z, params, *, input_channels, hidden_channels):
    """Pallas implementation of CDEFunc.forward.

    z: (..., H) -> returns (..., H, I), matching torch's
    `z.view(*z.shape[:-1], hidden_channels, input_channels)`.
    """
    I, H = input_channels, hidden_channels
    assert z.shape[-1] == H
    lead = z.shape[:-1]
    B = math.prod(lead) if lead else 1
    out_features = I * H

    ws, bs = params["weights"], params["biases"]
    num_hidden = len(ws) - 1
    assert num_hidden >= 1
    assert ws[-1].shape == (H, out_features)

    # ---- padded sizes (MXU-native contraction / lane-dense output) ---------
    Hp = _round_up(H, 128)
    OUTp = _round_up(out_features, 128)

    # ---- operand packing / padding -----------------------------------------
    def pad2(a, r, c):
        a = jnp.asarray(a, jnp.float32)
        return jnp.pad(a, ((0, r - a.shape[0]), (0, c - a.shape[1])))

    wh = jnp.stack([pad2(w, Hp, Hp) for w in ws[:-1]]).astype(jnp.bfloat16)
    bh = jnp.stack([jnp.pad(jnp.asarray(b, jnp.float32),
                            (0, Hp - H)).reshape(1, Hp) for b in bs[:-1]])
    wo = pad2(ws[-1], Hp, OUTp).astype(jnp.bfloat16)
    bo = jnp.pad(jnp.asarray(bs[-1], jnp.float32),
                 (0, OUTp - out_features)).reshape(1, OUTp)

    # ---- tile / grid selection ----------------------------------------------
    # Head-output tile: lane-dense multiple of 128, capped so the head weight
    # tile + out block stay small on v7x.
    if OUTp <= 2048:
        tn = OUTp
    else:
        tn = 128
        for cand in range(2048, 127, -128):
            if OUTp % cand == 0:
                tn = cand
                break
    nn = OUTp // tn

    # Batch tile: prefer 256 rows; otherwise split so the batch grid has >= 2
    # steps when possible (keeps both v7x TensorCores busy).
    B8 = _round_up(max(B, 1), 8)
    tb = 256
    if B8 < 2 * tb:
        tb = max(8, _round_up(B8 // 2, 8))

    def live_bytes(tb_):
        return (tb_ * Hp * 4 * 2                 # input tile, double-buffered
                + tb_ * tn * 4 * 2               # output tile, double-buffered
                + tb_ * Hp * 2                   # bf16 trunk scratch
                + num_hidden * Hp * Hp * 2       # hidden weights (Buffered(1))
                + num_hidden * Hp * 4            # hidden biases
                + Hp * tn * 2 * 2                # head weight tile
                + tn * 4 * 2)                    # head bias tile

    while tb > 8 and live_bytes(tb) > (20 << 20):
        tb = max(8, _round_up(tb // 2, 8))

    B_pad = _round_up(B8, tb)
    nb = B_pad // tb

    z2 = jnp.asarray(z, jnp.float32).reshape(B, H)
    z2 = jnp.pad(z2, ((0, B_pad - B), (0, Hp - H)))

    needed = live_bytes(tb)
    vmem_limit = int(min(max(2 * needed + (8 << 20), 32 << 20), 48 << 20))

    cost = pl.CostEstimate(
        flops=2 * B * H * H * num_hidden + 2 * B * H * out_features,
        transcendentals=B * out_features,
        bytes_accessed=int(z2.size * 4 + wh.size * 2 + bh.size * 4
                           + wo.size * 2 + bo.size * 4 + B_pad * OUTp * 4),
    )

    in_specs = [
        pl.BlockSpec((tb, Hp), lambda i, n: (i, 0)),       # z tile
        _resident_spec((num_hidden, Hp, Hp)),              # hidden weights
        _resident_spec((num_hidden, 1, Hp)),               # hidden biases
        pl.BlockSpec((Hp, tn), lambda i, n: (0, n)),       # head weight tile
        pl.BlockSpec((1, tn), lambda i, n: (0, n)),        # head bias tile
    ]
    out_spec = pl.BlockSpec((tb, tn), lambda i, n: (i, n))

    out = pl.pallas_call(
        functools.partial(_cdefunc_kernel, num_hidden=num_hidden),
        out_shape=jax.ShapeDtypeStruct((B_pad, OUTp), jnp.float32),
        grid_spec=pltpu.PrefetchScalarGridSpec(
            num_scalar_prefetch=0,
            grid=(nb, nn),
            in_specs=in_specs,
            out_specs=out_spec,
            scratch_shapes=[pltpu.VMEM((tb, Hp), jnp.bfloat16)],
        ),
        compiler_params=pltpu.CompilerParams(
            dimension_semantics=("parallel", "arbitrary"),
            vmem_limit_bytes=vmem_limit),
        cost_estimate=cost,
    )(z2, wh, bh, wo, bo)

    return out[:B, :out_features].reshape(*lead, H, I)


def cdefunc_reference(z, params, *, input_channels, hidden_channels,
                      matmul_dtype=jnp.float32):
    """Pure-JAX transcription of the PyTorch forward (for verification)."""
    ws, bs = params["weights"], params["biases"]
    h = jnp.asarray(z, jnp.float32)
    for w, b in zip(ws[:-1], bs[:-1]):
        h = jnp.maximum(
            jnp.dot(h.astype(matmul_dtype), jnp.asarray(w, matmul_dtype),
                    preferred_element_type=jnp.float32) + b, 0.0)
    y = jnp.tanh(
        jnp.dot(h.astype(matmul_dtype), jnp.asarray(ws[-1], matmul_dtype),
                preferred_element_type=jnp.float32) + bs[-1])
    return y.reshape(*z.shape[:-1], hidden_channels, input_channels)


def _init_params(key, input_channels, hidden_channels, num_layers):
    """torch.nn.Linear-style init; weights stored as (in, out) (= W.T)."""
    I, H = input_channels, hidden_channels
    dims = [(H, H)] * (num_layers - 1) + [(H, I * H)]
    weights, biases = [], []
    for (fi, fo) in dims:
        key, kw, kb = jax.random.split(key, 3)
        bound = 1.0 / math.sqrt(fi)
        weights.append(
            jax.random.uniform(kw, (fi, fo), jnp.float32, -bound, bound))
        biases.append(
            jax.random.uniform(kb, (fo,), jnp.float32, -bound, bound))
    return {"weights": weights, "biases": biases}


if __name__ == "__main__":
    B, T, I, H = 2, 8, 4, 32   # batch=2, seq=8, input_channels=4, hidden=32

    key = jax.random.PRNGKey(0)
    kz, kp2, kp3 = jax.random.split(key, 3)
    z = jax.random.uniform(kz, (B, T, H), jnp.float32, -1.0, 1.0)

    for num_layers, kp in ((2, kp2), (3, kp3)):
        params = _init_params(kp, I, H, num_layers)
        out = jax.block_until_ready(
            cdefunc_pallas(z, params, input_channels=I, hidden_channels=H))
        assert out.shape == (B, T, H, I), out.shape

        # Tight check vs a dtype-matched reference (bf16 MXU operands, f32 acc).
        ref_bf16 = cdefunc_reference(z, params, input_channels=I,
                                     hidden_channels=H,
                                     matmul_dtype=jnp.bfloat16)
        assert jnp.allclose(out, ref_bf16, rtol=1e-3, atol=1e-3), (
            num_layers, float(jnp.max(jnp.abs(out - ref_bf16))))

        # Looser check vs the pure-f32 PyTorch semantics (bf16 rounding only).
        ref_f32 = cdefunc_reference(z, params, input_channels=I,
                                    hidden_channels=H)
        assert jnp.allclose(out, ref_f32, rtol=5e-2, atol=5e-2), (
            num_layers, float(jnp.max(jnp.abs(out - ref_f32))))

    print("KERNEL_OK")
</pallas_src>

<mosaic_0001>
module attributes {stable_mosaic.version = 11 : i64} {
  func.func @_cdefunc_kernel(%arg0: i32, %arg1: i32, %arg2: memref<8x128xf32, #tpu.memory_space<vmem>>, %arg3: memref<1x128x128xbf16, #tpu.memory_space<vmem>>, %arg4: memref<1x1x128xf32, #tpu.memory_space<vmem>>, %arg5: memref<128x128xbf16, #tpu.memory_space<vmem>>, %arg6: memref<1x128xf32, #tpu.memory_space<vmem>>, %arg7: memref<8x128xf32, #tpu.memory_space<vmem>>, %arg8: memref<8x128xbf16, #tpu.memory_space<vmem>>) attributes {dimension_semantics = [#tpu.dimension_semantics<parallel>, #tpu.dimension_semantics<arbitrary>], iteration_bounds = array<i64: 2, 1>, scalar_prefetch = 0 : i64, scratch_operands = 1 : i64, tpu.core_type = #tpu.core_type<tc>, window_params = [{transform_indices = @transform_0, window_bounds = array<i64: 8, 128>}, {pipeline_mode = #tpu.pipeline_mode<synchronous>, transform_indices = @transform_1, window_bounds = array<i64: 1, 128, 128>}, {pipeline_mode = #tpu.pipeline_mode<synchronous>, transform_indices = @transform_2, window_bounds = array<i64: 1, 1, 128>}, {transform_indices = @transform_3, window_bounds = array<i64: 128, 128>}, {transform_indices = @transform_4, window_bounds = array<i64: 1, 128>}, {transform_indices = @transform_5, window_bounds = array<i64: 8, 128>}]} {
    %c0_i32 = arith.constant 0 : i32
    %0 = arith.cmpi eq, %arg1, %c0_i32 : i32
    %1 = arith.extui %0 : i1 to i32
    %c0_i32_0 = arith.constant 0 : i32
    %2 = arith.cmpi ne, %1, %c0_i32_0 : i32
    scf.if %2 {
      %c0_8 = arith.constant 0 : index
      %c0_9 = arith.constant 0 : index
      %11 = vector.load %arg2[%c0_8, %c0_9] : memref<8x128xf32, #tpu.memory_space<vmem>>, vector<8x128xf32>
      %c0_10 = arith.constant 0 : index
      %c0_11 = arith.constant 0 : index
      %c0_12 = arith.constant 0 : index
      %12 = vector.load %arg3[%c0_10, %c0_11, %c0_12] : memref<1x128x128xbf16, #tpu.memory_space<vmem>>, vector<1x128x128xbf16>
      %13 = vector.shape_cast %12 : vector<1x128x128xbf16> to vector<128x128xbf16>
      %c0_13 = arith.constant 0 : index
      %c0_14 = arith.constant 0 : index
      %c0_15 = arith.constant 0 : index
      %14 = vector.load %arg4[%c0_13, %c0_14, %c0_15] : memref<1x1x128xf32, #tpu.memory_space<vmem>>, vector<1x1x128xf32>
      %15 = vector.shape_cast %14 : vector<1x1x128xf32> to vector<1x128xf32>
      %16 = arith.truncf %11 : vector<8x128xf32> to vector<8x128xbf16>
      %cst_16 = arith.constant dense<0.000000e+00> : vector<8x128xf32>
      %17 = tpu.matmul %16, %13, %cst_16 {dimension_numbers = #tpu.dot_dimension_numbers<[1], [0], [0], [1], [0, 0, 1, 1], [], []>} : vector<8x128xbf16>, vector<128x128xbf16>, vector<8x128xf32> -> vector<8x128xf32>
      %18 = vector.broadcast %15 : vector<1x128xf32> to vector<8x128xf32>
      %19 = arith.addf %17, %18 : vector<8x128xf32>
      %cst_17 = arith.constant 0.000000e+00 : f32
      %20 = vector.broadcast %cst_17 : f32 to vector<8x128xf32>
      %21 = arith.maximumf %19, %20 : vector<8x128xf32>
      %22 = arith.truncf %21 : vector<8x128xf32> to vector<8x128xbf16>
      %c0_18 = arith.constant 0 : index
      %c0_19 = arith.constant 0 : index
      %23 = vector.load %arg8[%c0_18, %c0_19] : memref<8x128xbf16, #tpu.memory_space<vmem>>, vector<8x128xbf16>
      tpu.vector_store %arg8[%c0_18, %c0_19], %22 {strides = array<i32>} : memref<8x128xbf16, #tpu.memory_space<vmem>>, vector<8x128xbf16>,
    } else {
    }
    %c0 = arith.constant 0 : index
    %c0_1 = arith.constant 0 : index
    %3 = vector.load %arg8[%c0, %c0_1] : memref<8x128xbf16, #tpu.memory_space<vmem>>, vector<8x128xbf16>
    %c0_2 = arith.constant 0 : index
    %c0_3 = arith.constant 0 : index
    %4 = vector.load %arg5[%c0_2, %c0_3] : memref<128x128xbf16, #tpu.memory_space<vmem>>, vector<128x128xbf16>
    %cst = arith.constant dense<0.000000e+00> : vector<8x128xf32>
    %5 = tpu.matmul %3, %4, %cst {dimension_numbers = #tpu.dot_dimension_numbers<[1], [0], [0], [1], [0, 0, 1, 1], [], []>} : vector<8x128xbf16>, vector<128x128xbf16>, vector<8x128xf32> -> vector<8x128xf32>
    %c0_4 = arith.constant 0 : index
    %c0_5 = arith.constant 0 : index
    %6 = vector.load %arg6[%c0_4, %c0_5] : memref<1x128xf32, #tpu.memory_space<vmem>>, vector<1x128xf32>
    %7 = vector.broadcast %6 : vector<1x128xf32> to vector<8x128xf32>
    %8 = arith.addf %5, %7 : vector<8x128xf32>
    %9 = math.tanh %8 : vector<8x128xf32>
    %c0_6 = arith.constant 0 : index
    %c0_7 = arith.constant 0 : index
    %10 = vector.load %arg7[%c0_6, %c0_7] : memref<8x128xf32, #tpu.memory_space<vmem>>, vector<8x128xf32>
    tpu.vector_store %arg7[%c0_6, %c0_7], %9 {strides = array<i32>} : memref<8x128xf32, #tpu.memory_space<vmem>>, vector<8x128xf32>,
    return
  }
  func.func @transform_0(%arg0: i32, %arg1: i32) -> (i32, i32) {
    %c0_i32 = arith.constant 0 : i32
    %c0_i32_0 = arith.constant 0 : i32
    return %arg0, %c0_i32 : i32, i32
  }
  func.func @transform_1(%arg0: i32, %arg1: i32) -> (i32, i32, i32) {
    %c0_i32 = arith.constant 0 : i32
    %c0_i32_0 = arith.constant 0 : i32
    %c0_i32_1 = arith.constant 0 : i32
    %c0_i32_2 = arith.constant 0 : i32
    return %c0_i32, %c0_i32_0, %c0_i32_1 : i32, i32, i32
  }
  func.func @transform_2(%arg0: i32, %arg1: i32) -> (i32, i32, i32) {
    %c0_i32 = arith.constant 0 : i32
    %c0_i32_0 = arith.constant 0 : i32
    %c0_i32_1 = arith.constant 0 : i32
    %c0_i32_2 = arith.constant 0 : i32
    return %c0_i32, %c0_i32_0, %c0_i32_1 : i32, i32, i32
  }
  func.func @transform_3(%arg0: i32, %arg1: i32) -> (i32, i32) {
    %c0_i32 = arith.constant 0 : i32
    %c0_i32_0 = arith.constant 0 : i32
    return %c0_i32, %arg1 : i32, i32
  }
  func.func @transform_4(%arg0: i32, %arg1: i32) -> (i32, i32) {
    %c0_i32 = arith.constant 0 : i32
    %c0_i32_0 = arith.constant 0 : i32
    return %c0_i32, %arg1 : i32, i32
  }
  func.func @transform_5(%arg0: i32, %arg1: i32) -> (i32, i32) {
    %c0_i32 = arith.constant 0 : i32
    return %arg0, %arg1 : i32, i32
  }
}

</mosaic_0001>

<llo_original>
// kernel: tpu_custom_call.1
$region0: #{tpu_custom_call.1}
  #allocation0 [shape = 'u32[]', space=smem, size = 0x4, offset = 0x4, fixed_abs, tag = 'smem constant byte address 0x4 - core index']
  #allocation1 [shape = 'u32[144,128]{1,0:T(1,128)}', space=vmem, size = 0x12000, scoped, tag = 'internal scratch']
  #allocation2 [shape = 'bf16[8,128]{1,0:T(8,128)(2,1)}', space=vmem, size = 0x800, scoped, tag = 'scratch operand']
  %s0 = inlined_call_operand.hbm [shape: f32[16,128], index: 0, kind: input, shape index: {}]
  %s1 = inlined_call_operand.hbm [shape: bf16[1,128,128], index: 1, kind: input, shape index: {}]
  %s2 = inlined_call_operand.vmem [shape: f32[1,1,128], index: 2, kind: input, shape index: {}]
  %s3 = inlined_call_operand.hbm [shape: bf16[128,128], index: 3, kind: input, shape index: {}]
  %s4 = inlined_call_operand.vmem [shape: f32[1,128], index: 4, kind: input, shape index: {}]
  %s5 = inlined_call_operand.hbm [shape: f32[16,128], index: 5, kind: output, shape index: {}]
  %s6 = sld [smem:[#allocation0]]
  $region69: #{tpu_custom_call.1} parent=0
    _
  %s8 = ssub.s32 1, %s6
  %s9 = scalar_select 0, %s8, %s6
  $region1: #{tpu_custom_call.1} parent=0
    #allocation3 [shape = 'u8[8192]{0}', space=vmem, size = 0x2000, scoped, tag = 'input window, operand 0']
    #allocation4 [shape = 's32[2]{0}', space=sflag, size = 0x8, scoped, tag = 'scoped memory for tpu_custom_call.1']
    #allocation5 [shape = 's32[2]{0}', space=sflag, size = 0x8, scoped, tag = 'scoped memory for tpu_custom_call.1']
    #allocation6 [shape = 'u8[32768]{0}', space=vmem, size = 0x8000, scoped, tag = 'input window, operand 1, single buffered']
    #allocation7 [shape = 's32[1]{0}', space=sflag, size = 0x4, scoped, tag = 'scoped memory for tpu_custom_call.1']
    #allocation8 [shape = 'u8[32768]{0}', space=vmem, size = 0x8000, scoped, tag = 'input window, operand 3, single buffered']
    #allocation9 [shape = 'u8[8192]{0}', space=vmem, size = 0x2000, scoped, tag = 'output window, operand 0']
    %10 = vsyncpa [#allocation4], 0
    %s11 = scalar_lea.sflag [#allocation4], 1
    %12 = vsyncpa %s11, 0
    %13 = vsyncpa [#allocation7], 0
    %14 = vsyncpa [#allocation5], 0
    %s15 = scalar_lea.sflag [#allocation5], 1
    %16 = vsyncpa %s15, 0
    loop: start=0, step=1, limit=4
    $region2: #{tpu_custom_call.1} parent=1 // loop_pre_header
      _
    $region3: #{tpu_custom_call.1} parent=1 // loop_header
      %s18 = sphi 0, %s22
      %p19 = scmp.ge.s32.totalorder %s18, 4
      %s25 = sphi 0, %s37
      %s26 = sphi 0, %s33
      %s27 = sphi 0, %s25
      %s28 = sphi 0, %s26
      %s29 = sphi 0, %s27
      %s30 = sphi 0, %s28
      %s40 = sphi 0, %s42
      %s43 = sphi 0, %s40
      %s44 = sphi 0, %s43
      %s60 = sphi 0, %s44
      %s64 = sphi 0, %s64
      %s66 = sphi 0, %s64
      %s67 = sphi 0, %s66
      %s81 = sphi 0, %s67
      %s85 = sphi 0, %s85
      %s87 = sphi 0, %s85
      %s88 = sphi 0, %s87
      %s102 = sphi 0, %s88
      %s108 = sphi 0, %s110
      %s111 = sphi 0, %s108
      %s112 = sphi 0, %s111
      %s128 = sphi 0, %s112
      %s134 = sphi 0, %s136
      %s137 = sphi 0, %s134
      %s138 = sphi 0, %s137
      %s154 = sphi 0, %s138
      %s162 = sphi 0, %s164
      %s165 = sphi 0, %s162
      %s166 = sphi 0, %s165
      %s182 = sphi 0, %s166
    $region4: #{tpu_custom_call.1} parent=1 // loop_header_branch
      %21 = sbr.rel (%p19) target = $region8
    $region5: #{tpu_custom_call.1} parent=1 // loop_body
      %s23 = ssub.s32 %s18, 1
      %s24 = ssub.s32 %s18, 2
      %s31 = sadd.s32 1, %s26
      %p32 = scmp.ge.s32.totalorder %s31, 1
      %s33 = scalar_select %p32, 0, %s31
      %s34 = sadd.s32 1, %s25
      %s35 = scalar_select %p32, %s34, %s25
      %p36 = scmp.ge.s32.totalorder %s35, 2
      %s37 = scalar_select %p36, 0, %s35
      %s38 = ssub.s32 %s25, %s37
      %p39 = scmp.eq.s32.totalorder %s38, 0
      %s41 = sadd.s32 %s40, 1
      %s42 = scalar_select %p39, %s40, %s41
      %p45 = pneg %p39
      %p46 = scmp.eq.s32.totalorder %s18, 1
      %p47 = por %p45, %p46
      %p48 = scmp.ne.s32.totalorder %s40, %s43
      %p49 = scmp.eq.s32.totalorder %s18, 0
      %p50 = por %p48, %p49
      %p51 = scmp.ne.s32.totalorder %s40, %s43
      %p52 = scmp.eq.s32.totalorder %s23, 1
      %p53 = por %p51, %p52
      %p54 = scmp.ne.s32.totalorder %s43, %s44
      %p55 = scmp.eq.s32.totalorder %s23, 0
      %p56 = por %p54, %p55
      %p57 = scmp.ne.s32.totalorder %s43, %s44
      %p58 = scmp.eq.s32.totalorder %s24, 1
      %p59 = por %p57, %p58
      %p61 = scmp.ne.s32.totalorder %s44, %s60
      %p62 = scmp.eq.s32.totalorder %s24, 0
      %p63 = por %p61, %p62
      %s65 = sadd.s32 %s64, 1
      %p68 = scmp.eq.s32.totalorder %s18, 1
      %p69 = scmp.ne.s32.totalorder %s64, %s66
      %p70 = scmp.eq.s32.totalorder %s18, 0
      %p71 = por %p69, %p70
      %p72 = scmp.ne.s32.totalorder %s64, %s66
      %p73 = scmp.eq.s32.totalorder %s23, 1
      %p74 = por %p72, %p73
      %p75 = scmp.ne.s32.totalorder %s66, %s67
      %p76 = scmp.eq.s32.totalorder %s23, 0
      %p77 = por %p75, %p76
      %p78 = scmp.ne.s32.totalorder %s66, %s67
      %p79 = scmp.eq.s32.totalorder %s24, 1
      %p80 = por %p78, %p79
      %p82 = scmp.ne.s32.totalorder %s67, %s81
      %p83 = scmp.eq.s32.totalorder %s24, 0
      %p84 = por %p82, %p83
      %s86 = sadd.s32 %s85, 1
      %p89 = scmp.eq.s32.totalorder %s18, 1
      %p90 = scmp.ne.s32.totalorder %s85, %s87
      %p91 = scmp.eq.s32.totalorder %s18, 0
      %p92 = por %p90, %p91
      %p93 = scmp.ne.s32.totalorder %s85, %s87
      %p94 = scmp.eq.s32.totalorder %s23, 1
      %p95 = por %p93, %p94
      %p96 = scmp.ne.s32.totalorder %s87, %s88
      %p97 = scmp.eq.s32.totalorder %s23, 0
      %p98 = por %p96, %p97
      %p99 = scmp.ne.s32.totalorder %s87, %s88
      %p100 = scmp.eq.s32.totalorder %s24, 1
      %p101 = por %p99, %p100
      %p103 = scmp.ne.s32.totalorder %s88, %s102
      %p104 = scmp.eq.s32.totalorder %s24, 0
      %p105 = por %p103, %p104
      %s106 = ssub.s32 %s26, %s33
      %p107 = scmp.eq.s32.totalorder %s106, 0
      %s109 = sadd.s32 %s108, 1
      %s110 = scalar_select %p107, %s108, %s109
      %p113 = pneg %p107
      %p114 = scmp.eq.s32.totalorder %s18, 1
      %p115 = por %p113, %p114
      %p116 = scmp.ne.s32.totalorder %s108, %s111
      %p117 = scmp.eq.s32.totalorder %s18, 0
      %p118 = por %p116, %p117
      %p119 = scmp.ne.s32.totalorder %s108, %s111
      %p120 = scmp.eq.s32.totalorder %s23, 1
      %p121 = por %p119, %p120
      %p122 = scmp.ne.s32.totalorder %s111, %s112
      %p123 = scmp.eq.s32.totalorder %s23, 0
      %p124 = por %p122, %p123
      %p125 = scmp.ne.s32.totalorder %s111, %s112
      %p126 = scmp.eq.s32.totalorder %s24, 1
      %p127 = por %p125, %p126
      %p129 = scmp.ne.s32.totalorder %s112, %s128
      %p130 = scmp.eq.s32.totalorder %s24, 0
      %p131 = por %p129, %p130
      %s132 = ssub.s32 %s26, %s33
      %p133 = scmp.eq.s32.totalorder %s132, 0
      %s135 = sadd.s32 %s134, 1
      %s136 = scalar_select %p133, %s134, %s135
      %p139 = pneg %p133
      %p140 = scmp.eq.s32.totalorder %s18, 1
      %p141 = por %p139, %p140
      %p142 = scmp.ne.s32.totalorder %s134, %s137
      %p143 = scmp.eq.s32.totalorder %s18, 0
      %p144 = por %p142, %p143
      %p145 = scmp.ne.s32.totalorder %s134, %s137
      %p146 = scmp.eq.s32.totalorder %s23, 1
      %p147 = por %p145, %p146
      %p148 = scmp.ne.s32.totalorder %s137, %s138
      %p149 = scmp.eq.s32.totalorder %s23, 0
      %p150 = por %p148, %p149
      %p151 = scmp.ne.s32.totalorder %s137, %s138
      %p152 = scmp.eq.s32.totalorder %s24, 1
      %p153 = por %p151, %p152
      %p155 = scmp.ne.s32.totalorder %s138, %s154
      %p156 = scmp.eq.s32.totalorder %s24, 0
      %p157 = por %p155, %p156
      %s158 = ssub.s32 %s25, %s37
      %s159 = ssub.s32 %s26, %s33
      %s160 = sor.u32 %s158, %s159
      %p161 = scmp.eq.s32.totalorder %s160, 0
      %s163 = sadd.s32 %s162, 1
      %s164 = scalar_select %p161, %s162, %s163
      %p167 = pneg %p161
      %p168 = scmp.eq.s32.totalorder %s18, 1
      %p169 = por %p167, %p168
      %p170 = scmp.ne.s32.totalorder %s162, %s165
      %p171 = scmp.eq.s32.totalorder %s18, 0
      %p172 = por %p170, %p171
      %p173 = scmp.ne.s32.totalorder %s162, %s165
      %p174 = scmp.eq.s32.totalorder %s23, 1
      %p175 = por %p173, %p174
      %p176 = scmp.ne.s32.totalorder %s165, %s166
      %p177 = scmp.eq.s32.totalorder %s23, 0
      %p178 = por %p176, %p177
      %p179 = scmp.ne.s32.totalorder %s165, %s166
      %p180 = scmp.eq.s32.totalorder %s24, 1
      %p181 = por %p179, %p180
      %p183 = scmp.ne.s32.totalorder %s166, %s182
      %p184 = scmp.eq.s32.totalorder %s24, 0
      %p185 = por %p183, %p184
      %p186 = scmp.le.s32.totalorder 1, %s18
      %p187 = scmp.lt.s32.totalorder %s18, 3
      %p188 = pnand %p186, %p187
      %p189 = pneg %p188
      // Predicated region
      $region9: #{tpu_custom_call.1} parent=5 // pred_check
        _
      $region10: #{tpu_custom_call.1} parent=5 // pred_check_branch
        %191 = sbr.rel (%p188) target = $region12
      $region11: #{tpu_custom_call.1} parent=5 // pred_region
        %s192 = ssub.s32 %s18, 1
        // Predicated region
        $region13: #{tpu_custom_call.1} parent=11 // pred_check
          %p193 = pneg %p77
        $region14: #{tpu_custom_call.1} parent=11 // pred_check_branch
          %195 = sbr.rel (%p193) target = $region16
        $region15: #{tpu_custom_call.1} parent=11 // pred_region
          %s197 = ssub.s32 1024, 1024
          %198 = vsyncadd [#allocation7], %s197
          %s199 = sshll.u32 [#allocation6], 4
          %s200 = int_to_ptr.vmem [resolvable:$true] %s199
          %205 = dma.hbm_to_vmem [thread:$0]  %s1, 1024, %s200, [#allocation7], 64, 64, 4
        $region16: #{tpu_custom_call.1} parent=11 // pred_fallthru
          _
        // Predicated region
        $region17: #{tpu_custom_call.1} parent=11 // pred_check
          %p206 = pneg %p98
        $region18: #{tpu_custom_call.1} parent=11 // pred_check_branch
          %208 = sbr.rel (%p206) target = $region20
        $region19: #{tpu_custom_call.1} parent=11 // pred_region
          _
        $region20: #{tpu_custom_call.1} parent=11 // pred_fallthru
          _
        // Predicated region
        $region21: #{tpu_custom_call.1} parent=11 // pred_check
          %p209 = pneg %p124
        $region22: #{tpu_custom_call.1} parent=11 // pred_check_branch
          %211 = sbr.rel (%p209) target = $region24
        $region23: #{tpu_custom_call.1} parent=11 // pred_region
          %s213 = ssub.s32 1024, 1024
          %214 = vsyncadd [#allocation7], %s213
          %s215 = smul.addr %s28, 64
          %s216 = scalar_lea.hbm %s3, %s215
          %s217 = sshll.u32 [#allocation8], 4
          %s218 = int_to_ptr.vmem [resolvable:$true] %s217
          %223 = dma.hbm_to_vmem [thread:$0]  %s216, 1024, %s218, [#allocation7], 64, 64, 4
        $region24: #{tpu_custom_call.1} parent=11 // pred_fallthru
          _
        // Predicated region
        $region25: #{tpu_custom_call.1} parent=11 // pred_check
          %p224 = pneg %p150
        $region26: #{tpu_custom_call.1} parent=11 // pred_check_branch
          %226 = sbr.rel (%p224) target = $region28
        $region27: #{tpu_custom_call.1} parent=11 // pred_region
          %p227 = scmp.lt.s32.totalorder %s28, 0
          %s228 = scalar_select %p227, %s28, 0
          %s229 = scalar_lea.vmem %s4, %s228
        $region28: #{tpu_custom_call.1} parent=11 // pred_fallthru
          _
      $region12: #{tpu_custom_call.1} parent=5 // pred_fallthru
        _
      %p230 = scmp.lt.s32.totalorder %s18, 2
      // Predicated region
      $region29: #{tpu_custom_call.1} parent=5 // pred_check
        %p231 = pneg %p230
      $region30: #{tpu_custom_call.1} parent=5 // pred_check_branch
        %233 = sbr.rel (%p231) target = $region32
      $region31: #{tpu_custom_call.1} parent=5 // pred_region
        // Predicated region
        $region33: #{tpu_custom_call.1} parent=31 // pred_check
          %p234 = pneg %p50
        $region34: #{tpu_custom_call.1} parent=31 // pred_check_branch
          %236 = sbr.rel (%p234) target = $region36
        $region35: #{tpu_custom_call.1} parent=31 // pred_region
          %s237 = sand.u32 %s40, 1
          %s238 = scalar_lea.sflag [#allocation4], %s237
          %s239 = sand.u32 %s40, 1
          %s240 = smul.addr %s239, 8
          %s241 = scalar_lea.vmem [#allocation3], %s240
          %s243 = ssub.s32 128, 128
          %244 = vsyncadd %s238, %s243
          %s245 = smul.addr %s25, 128
          %s246 = scalar_lea.hbm %s0, %s245
          %s248 = sshll.u32 %s241, 4
          %s249 = int_to_ptr.vmem [resolvable:$true] %s248
          %251 = dma.hbm_to_vmem [thread:$0]  %s246, 128, %s249, %s238
        $region36: #{tpu_custom_call.1} parent=31 // pred_fallthru
          _
      $region32: #{tpu_custom_call.1} parent=5 // pred_fallthru
        _
      %p252 = scmp.le.s32.totalorder 1, %s18
      %p253 = scmp.lt.s32.totalorder %s18, 3
      %p254 = pnand %p252, %p253
      %p255 = pneg %p254
      // Predicated region
      $region37: #{tpu_custom_call.1} parent=5 // pred_check
        _
      $region38: #{tpu_custom_call.1} parent=5 // pred_check_branch
        %257 = sbr.rel (%p254) target = $region40
      $region39: #{tpu_custom_call.1} parent=5 // pred_region
        %s258 = ssub.s32 %s18, 1
        %s259 = sand.u32 %s43, 1
        %s260 = scalar_lea.sflag [#allocation4], %s259
        %s261 = sand.u32 %s43, 1
        %s262 = smul.addr %s261, 8
        %s263 = scalar_lea.vmem [#allocation3], %s262
        // Predicated region
        $region41: #{tpu_custom_call.1} parent=39 // pred_check
          %p264 = pneg %p56
        $region42: #{tpu_custom_call.1} parent=39 // pred_check_branch
          %266 = sbr.rel (%p264) target = $region44
        $region43: #{tpu_custom_call.1} parent=39 // pred_region
          %267 = dma.done %s260, 128
        $region44: #{tpu_custom_call.1} parent=39 // pred_fallthru
          _
        // Predicated region
        $region45: #{tpu_custom_call.1} parent=39 // pred_check
          %p268 = pneg %p77
        $region46: #{tpu_custom_call.1} parent=39 // pred_check_branch
          %270 = sbr.rel (%p268) target = $region48
        $region47: #{tpu_custom_call.1} parent=39 // pred_region
          %271 = dma.done [#allocation7], 1024
        $region48: #{tpu_custom_call.1} parent=39 // pred_fallthru
          _
        // Predicated region
        $region49: #{tpu_custom_call.1} parent=39 // pred_check
          %p272 = pneg %p124
        $region50: #{tpu_custom_call.1} parent=39 // pred_check_branch
          %274 = sbr.rel (%p272) target = $region52
        $region51: #{tpu_custom_call.1} parent=39 // pred_region
          %275 = dma.done [#allocation7], 1024
        $region52: #{tpu_custom_call.1} parent=39 // pred_fallthru
          _
        %s276 = sand.u32 %s43, 1
        %s277 = scalar_lea.sflag [#allocation4], %s276
        %s278 = sand.u32 %s43, 1
        %s279 = smul.addr %s278, 8
        %s280 = scalar_lea.vmem [#allocation3], %s279
        %p281 = pneg %p56
        %p282 = pneg %p53
        %p283 = pneg %p77
        %p284 = pneg %p74
        %p285 = pneg %p98
        %p286 = pneg %p95
        %p287 = pneg %p124
        %p288 = pneg %p121
        %p289 = scmp.lt.s32.totalorder %s28, 0
        %s290 = scalar_select %p289, %s28, 0
        %s291 = scalar_lea.vmem %s4, %s290
        %p292 = pneg %p150
        %p293 = pneg %p147
        %p294 = pneg %p178
        %p295 = pneg %p175
        %s296 = sand.u32 %s165, 1
        %s297 = scalar_lea.sflag [#allocation5], %s296
        %s298 = sand.u32 %s165, 1
        %s299 = smul.addr %s298, 8
        %s300 = scalar_lea.vmem [#allocation9], %s299
        %p301 = scmp.lt.s32.totalorder %s28, 0
        %s302 = scalar_select %p301, %s28, 0
        %s303 = scalar_lea.vmem %s4, %s302
        %p305 = scmp.eq.s32.totalorder %s28, 0
        // Predicated region
        $region53: #{tpu_custom_call.1} parent=39 // pred_check
          %p306 = pneg %p305
        $region54: #{tpu_custom_call.1} parent=39 // pred_check_branch
          %308 = sbr.rel (%p306) target = $region56
        $region55: #{tpu_custom_call.1} parent=39 // pred_region
          %v309 = vld [vmem:[%s263] sm:$0xff]
          %v310 = vld [vmem:[#allocation6] sm:$0xf]
          %v311 = vld [vmem:[#allocation6 + $0x4] sm:$0xf]
          %v312 = vld [vmem:[#allocation6 + $0x8] sm:$0xf]
          %v313 = vld [vmem:[#allocation6 + $0xc] sm:$0xf]
          %v314 = vld [vmem:[#allocation6 + $0x10] sm:$0xf]
          %v315 = vld [vmem:[#allocation6 + $0x14] sm:$0xf]
          %v316 = vld [vmem:[#allocation6 + $0x18] sm:$0xf]
          %v317 = vld [vmem:[#allocation6 + $0x1c] sm:$0xf]
          %v318 = vld [vmem:[#allocation6 + $0x20] sm:$0xf]
          %v319 = vld [vmem:[#allocation6 + $0x24] sm:$0xf]
          %v320 = vld [vmem:[#allocation6 + $0x28] sm:$0xf]
          %v321 = vld [vmem:[#allocation6 + $0x2c] sm:$0xf]
          %v322 = vld [vmem:[#allocation6 + $0x30] sm:$0xf]
          %v323 = vld [vmem:[#allocation6 + $0x34] sm:$0xf]
          %v324 = vld [vmem:[#allocation6 + $0x38] sm:$0xf]
          %v325 = vld [vmem:[#allocation6 + $0x3c] sm:$0xf]
          %v326 = vld [vmem:[%s2] sm:$0x1]
          %v327 = vpack.c.bf16 %v309, %v309
          %v329 = vlaneseq
          %v330 = vshrl.u32 %v329, 7
          %v331 = vsub.s32 0, %v330
          %v332 = vrot.slane %v326, %v331
          %v350 = vunpack.c.l.b16 %v310
          %v351 = vunpack.c.l.b16 %v311
          %v352 = vunpack.c.l.b16 %v312
          %v353 = vunpack.c.l.b16 %v313
          %v354 = vunpack.c.l.b16 %v314
          %v355 = vunpack.c.l.b16 %v315
          %v356 = vunpack.c.l.b16 %v316
          %v357 = vunpack.c.l.b16 %v317
          %v358 = vunpack.c.l.b16 %v318
          %v359 = vunpack.c.l.b16 %v319
          %v360 = vunpack.c.l.b16 %v320
          %v361 = vunpack.c.l.b16 %v321
          %v362 = vunpack.c.l.b16 %v322
          %v363 = vunpack.c.l.b16 %v323
          %v364 = vunpack.c.l.b16 %v324
          %v365 = vunpack.c.l.b16 %v325
          %v366 = vpack.c.b16 %v351, %v350
          %v367 = vpack.c.b16 %v353, %v352
          %v368 = vpack.c.b16 %v355, %v354
          %v369 = vpack.c.b16 %v357, %v356
          %v370 = vpack.c.b16 %v359, %v358
          %v371 = vpack.c.b16 %v361, %v360
          %v372 = vpack.c.b16 %v363, %v362
          %v373 = vpack.c.b16 %v365, %v364
          %382 = vmatprep.subr.bf16.mxu0 0
          %383 = vmatpush1.bf16.msra.mxu0 %v373
          %384 = vmatprep.subr.bf16.mxu0 0
          %385 = vmatpush1.bf16.msra.mxu0 %v372
          %386 = vmatprep.subr.bf16.mxu0 0
          %387 = vmatpush1.bf16.msra.mxu0 %v371
          %388 = vmatprep.subr.bf16.mxu0 0
          %389 = vmatpush1.bf16.msra.mxu0 %v370
          %390 = vmatprep.subr.bf16.mxu0 0
          %391 = vmatpush1.bf16.msra.mxu0 %v369
          %392 = vmatprep.subr.bf16.mxu0 0
          %393 = vmatpush1.bf16.msra.mxu0 %v368
          %394 = vmatprep.subr.bf16.mxu0 0
          %395 = vmatpush1.bf16.msra.mxu0 %v367
          %396 = vmatprep.subr.bf16.mxu0 0
          %397 = vmatpush1.bf16.msra.mxu0 %v366
          %398 = vmatprep.subr.bf16.mxu0 0
          %399 = vmatpush2.bf16.msra.mxu0 0
          %400 = vmatprep.subr.bf16.mxu0 0
          %401 = vmatpush2.bf16.msra.mxu0 0
          %402 = vmatprep.subr.bf16.mxu0 0
          %403 = vmatpush2.bf16.msra.mxu0 0
          %404 = vmatprep.subr.bf16.mxu0 0
          %405 = vmatpush2.bf16.msra.mxu0 0
          %406 = vmatprep.subr.bf16.mxu0 0
          %407 = vmatpush2.bf16.msra.mxu0 0
          %408 = vmatprep.subr.bf16.mxu0 0
          %409 = vmatpush2.bf16.msra.mxu0 0
          %410 = vmatprep.subr.bf16.mxu0 0
          %411 = vmatpush2.bf16.msra.mxu0 0
          %412 = vmatprep.subr.bf16.mxu0 0
          %413 = vmatpush2.bf16.msra.mxu0 0
          %414 = vmatprep.mubr.bf16.mxu0 0
          %415 = vmatmul.mubr.bf16.gmra.mxu0 %v327
          %v416 = vpop.f32.mrf.mxu0
          %v417 = vadd.f32 %v332, %v416
          %v418 = vpop.f32.mrf.mxu0
          %v419 = vpop.f32.mrf.mxu0
          %v420 = vpop.f32.mrf.mxu0
          %421 = vdwg.mxu0
          %v422 = vmax.f32 %v417, 0.0
          %v423 = vpack.c.bf16 %v422, %v422
          %424 = vst [vmem:[#allocation2] sm:$0xf] %v423
        $region56: #{tpu_custom_call.1} parent=39 // pred_fallthru
          _
        %v425 = vld [vmem:[#allocation2] sm:$0xf]
        %v426 = vld [vmem:[#allocation8] sm:$0xf]
        %v427 = vld [vmem:[#allocation8 + $0x4] sm:$0xf]
        %v428 = vld [vmem:[#allocation8 + $0x8] sm:$0xf]
        %v429 = vld [vmem:[#allocation8 + $0xc] sm:$0xf]
        %v430 = vld [vmem:[#allocation8 + $0x10] sm:$0xf]
        %v431 = vld [vmem:[#allocation8 + $0x14] sm:$0xf]
        %v432 = vld [vmem:[#allocation8 + $0x18] sm:$0xf]
        %v433 = vld [vmem:[#allocation8 + $0x1c] sm:$0xf]
        %v434 = vld [vmem:[#allocation8 + $0x20] sm:$0xf]
        %v435 = vld [vmem:[#allocation8 + $0x24] sm:$0xf]
        %v436 = vld [vmem:[#allocation8 + $0x28] sm:$0xf]
        %v437 = vld [vmem:[#allocation8 + $0x2c] sm:$0xf]
        %v438 = vld [vmem:[#allocation8 + $0x30] sm:$0xf]
        %v439 = vld [vmem:[#allocation8 + $0x34] sm:$0xf]
        %v440 = vld [vmem:[#allocation8 + $0x38] sm:$0xf]
        %v441 = vld [vmem:[#allocation8 + $0x3c] sm:$0xf]
        %v442 = vld [vmem:[%s303] sm:$0x1]
        %v444 = vlaneseq
        %v445 = vshrl.u32 %v444, 7
        %v446 = vsub.s32 0, %v445
        %v447 = vrot.slane %v442, %v446
        %v465 = vunpack.c.l.b16 %v426
        %v466 = vunpack.c.l.b16 %v427
        %v467 = vunpack.c.l.b16 %v428
        %v468 = vunpack.c.l.b16 %v429
        %v469 = vunpack.c.l.b16 %v430
        %v470 = vunpack.c.l.b16 %v431
        %v471 = vunpack.c.l.b16 %v432
        %v472 = vunpack.c.l.b16 %v433
        %v473 = vunpack.c.l.b16 %v434
        %v474 = vunpack.c.l.b16 %v435
        %v475 = vunpack.c.l.b16 %v436
        %v476 = vunpack.c.l.b16 %v437
        %v477 = vunpack.c.l.b16 %v438
        %v478 = vunpack.c.l.b16 %v439
        %v479 = vunpack.c.l.b16 %v440
        %v480 = vunpack.c.l.b16 %v441
        %v481 = vpack.c.b16 %v466, %v465
        %v482 = vpack.c.b16 %v468, %v467
        %v483 = vpack.c.b16 %v470, %v469
        %v484 = vpack.c.b16 %v472, %v471
        %v485 = vpack.c.b16 %v474, %v473
        %v486 = vpack.c.b16 %v476, %v475
        %v487 = vpack.c.b16 %v478, %v477
        %v488 = vpack.c.b16 %v480, %v479
        %497 = vmatprep.subr.bf16.mxu0 0
        %498 = vmatpush1.bf16.msra.mxu0 %v488
        %499 = vmatprep.subr.bf16.mxu0 0
        %500 = vmatpush1.bf16.msra.mxu0 %v487
        %501 = vmatprep.subr.bf16.mxu0 0
        %502 = vmatpush1.bf16.msra.mxu0 %v486
        %503 = vmatprep.subr.bf16.mxu0 0
        %504 = vmatpush1.bf16.msra.mxu0 %v485
        %505 = vmatprep.subr.bf16.mxu0 0
        %506 = vmatpush1.bf16.msra.mxu0 %v484
        %507 = vmatprep.subr.bf16.mxu0 0
        %508 = vmatpush1.bf16.msra.mxu0 %v483
        %509 = vmatprep.subr.bf16.mxu0 0
        %510 = vmatpush1.bf16.msra.mxu0 %v482
        %511 = vmatprep.subr.bf16.mxu0 0
        %512 = vmatpush1.bf16.msra.mxu0 %v481
        %513 = vmatprep.subr.bf16.mxu0 0
        %514 = vmatpush2.bf16.msra.mxu0 0
        %515 = vmatprep.subr.bf16.mxu0 0
        %516 = vmatpush2.bf16.msra.mxu0 0
        %517 = vmatprep.subr.bf16.mxu0 0
        %518 = vmatpush2.bf16.msra.mxu0 0
        %519 = vmatprep.subr.bf16.mxu0 0
        %520 = vmatpush2.bf16.msra.mxu0 0
        %521 = vmatprep.subr.bf16.mxu0 0
        %522 = vmatpush2.bf16.msra.mxu0 0
        %523 = vmatprep.subr.bf16.mxu0 0
        %524 = vmatpush2.bf16.msra.mxu0 0
        %525 = vmatprep.subr.bf16.mxu0 0
        %526 = vmatpush2.bf16.msra.mxu0 0
        %527 = vmatprep.subr.bf16.mxu0 0
        %528 = vmatpush2.bf16.msra.mxu0 0
        %529 = vmatprep.mubr.bf16.mxu0 0
        %530 = vmatmul.mubr.bf16.gmra.mxu0 %v425
        %v531 = vpop.f32.mrf.mxu0
        %v532 = vadd.f32 %v447, %v531
        %v533 = vpop.f32.mrf.mxu0
        %v534 = vpop.f32.mrf.mxu0
        %v535 = vpop.f32.mrf.mxu0
        %536 = vdwg.mxu0
        %v537 = vtanh.pop %v532
        %538 = vst [vmem:[%s300] sm:$0xff] %v537
        %s539 = sand.u32 %s165, 1
        %s540 = scalar_lea.sflag [#allocation5], %s539
        %s541 = sand.u32 %s165, 1
        %s542 = smul.addr %s541, 8
        %s543 = scalar_lea.vmem [#allocation9], %s542
        // Predicated region
        $region57: #{tpu_custom_call.1} parent=39 // pred_check
          %p544 = pneg %p175
        $region58: #{tpu_custom_call.1} parent=39 // pred_check_branch
          %546 = sbr.rel (%p544) target = $region60
        $region59: #{tpu_custom_call.1} parent=39 // pred_region
          %s548 = ssub.s32 128, 128
          %549 = vsyncadd %s540, %s548
          %s550 = sadd.s32 %s28, %s27
          %s551 = smul.addr %s550, 128
          %s552 = scalar_lea.hbm %s5, %s551
          %s554 = sshll.u32 %s543, 4
          %s555 = int_to_ptr.vmem [resolvable:$true] %s554
          %557 = dma.vmem_to_hbm [thread:$0]  %s555, 128, %s552, %s540
        $region60: #{tpu_custom_call.1} parent=39 // pred_fallthru
          _
      $region40: #{tpu_custom_call.1} parent=5 // pred_fallthru
        _
      %p558 = scmp.le.s32.totalorder 2, %s18
      // Predicated region
      $region61: #{tpu_custom_call.1} parent=5 // pred_check
        %p559 = pneg %p558
      $region62: #{tpu_custom_call.1} parent=5 // pred_check_branch
        %561 = sbr.rel (%p559) target = $region64
      $region63: #{tpu_custom_call.1} parent=5 // pred_region
        %s562 = ssub.s32 %s18, 2
        // Predicated region
        $region65: #{tpu_custom_call.1} parent=63 // pred_check
          %p563 = pneg %p181
        $region66: #{tpu_custom_call.1} parent=63 // pred_check_branch
          %565 = sbr.rel (%p563) target = $region68
        $region67: #{tpu_custom_call.1} parent=63 // pred_region
          %s566 = sand.u32 %s166, 1
          %s567 = scalar_lea.sflag [#allocation5], %s566
          %s568 = sand.u32 %s166, 1
          %s569 = smul.addr %s568, 8
          %s570 = scalar_lea.vmem [#allocation9], %s569
          %571 = dma.done %s567, 128
        $region68: #{tpu_custom_call.1} parent=63 // pred_fallthru
          _
      $region64: #{tpu_custom_call.1} parent=5 // pred_fallthru
        _
    $region6: #{tpu_custom_call.1} parent=1 // loop_footer
      %s22 = sadd.s32 1, %s18
    $region7: #{tpu_custom_call.1} parent=1 // loop_footer_branch
      %17 = sbr.rel target = $region3
    $region8: #{tpu_custom_call.1} parent=1 // loop_exit
      _
    %572 = vsyncpa [#allocation4], 1
    %s573 = scalar_lea.sflag [#allocation4], 1
    %574 = vsyncpa %s573, 1
    %575 = vsyncpa [#allocation7], 1
    %576 = vsyncpa [#allocation5], 1
    %s577 = scalar_lea.sflag [#allocation5], 1
    %578 = vsyncpa %s577, 1

</llo_original>
